<compile_context>
chip_gen: v5e
topology: v5e:2x2
jax: 0.10.0
libtpu: 0.0.40
codegen_flags: <defaults>
</compile_context>

<pallas_src>
import jax
import jax.numpy as jnp
from jax.experimental import pallas as pl
from jax.experimental.pallas import tpu as pltpu


def _round_up(a: int, b: int) -> int:
    return (a + b - 1) // b * b


def _relu_conv_bn_kernel(w_ref, x_ref, b_ref, o_ref, acc_ref):
    """One (TCO, TM) output tile.  grid = (C_out tiles, M tiles, K tiles).

    w_ref  : (TCO, TK)  BN-folded conv weights           (MXU LHS)
    x_ref  : (TK,  TM)  im2col input patches, pre-ReLU   (MXU RHS)
    b_ref  : (TCO, 1)   BN-folded bias (f32)
    o_ref  : (TCO, TM)  output tile (lane-dense)
    acc_ref: VMEM (TCO, TM) f32 accumulator, resident across the K axis
    """
    kk = pl.program_id(2)

    @pl.when(kk == 0)
    def _init():
        acc_ref[...] = jnp.zeros_like(acc_ref)

    rhs = jnp.maximum(x_ref[...], 0)                      # fused ReLU on the VPU
    acc_ref[...] += jnp.dot(w_ref[...], rhs,
                            preferred_element_type=jnp.float32)

    @pl.when(kk == pl.num_programs(2) - 1)
    def _finalize():
        o_ref[...] = (acc_ref[...] + b_ref[...]).astype(o_ref.dtype)


def relu_conv_bn(x, conv_weight, bn_gamma, bn_beta, bn_mean, bn_var,
                 *, stride=1, eps=1e-5, tm_cap=2048, tco_cap=256,
                 vmem_budget=12 * 1024 * 1024):
    """Fused ReLU -> Conv2d(bias=False) -> BatchNorm2d (eval mode) on TPU.

    x           : (B, C_in, H, W)        NCHW, like the PyTorch module
    conv_weight : (C_out, C_in, kH, kW)  OIHW, like nn.Conv2d.weight
    bn_*        : (C_out,)  gamma/beta (pass ones/zeros if affine=False),
                  running_mean / running_var
    Padding follows the module: 0 if (stride == 1 and kernel == 1) else 1.
    """
    B, C_in, H, W = x.shape
    C_out, C_in_w, kH, kW = conv_weight.shape
    assert C_in == C_in_w, (C_in, C_in_w)
    s = int(stride)
    pad = 0 if (s == 1 and kH == 1 and kW == 1) else 1
    Ho = (H + 2 * pad - kH) // s + 1
    Wo = (W + 2 * pad - kW) // s + 1

    # ---- fold BN into the conv (free at trace time) ----------------------
    scale = bn_gamma * jax.lax.rsqrt(bn_var + eps)                 # (C_out,)
    w_folded = conv_weight * scale[:, None, None, None]            # (C_out,C_in,kH,kW)
    bias = (bn_beta - bn_mean * scale).astype(jnp.float32)         # (C_out,)

    # Weight matrix (C_out, K) with K ordered as ((dy*kW + dx)*C_in + ci).
    K = kH * kW * C_in
    M = B * Ho * Wo
    w_t = jnp.transpose(w_folded, (0, 2, 3, 1)).reshape(C_out, K).astype(x.dtype)

    # ---- im2col patches (K, M), M = B*Ho*Wo on the lane axis --------------
    # ReLU stays inside the kernel; zero padding is ReLU-invariant.
    xt = jnp.transpose(x, (1, 0, 2, 3))                            # (C_in, B, H, W)
    if pad:
        xt = jnp.pad(xt, ((0, 0), (0, 0), (pad, pad), (pad, pad)))
    if kH == 1 and kW == 1 and s == 1:
        col = xt                                # 1x1/stride-1 fast path: no im2col
    else:
        taps = [xt[:, :, dy:dy + (Ho - 1) * s + 1:s, dx:dx + (Wo - 1) * s + 1:s]
                for dy in range(kH) for dx in range(kW)]
        col = jnp.stack(taps, axis=0)           # (kH*kW, C_in, B, Ho, Wo)
    rhs = col.reshape(K, M).astype(x.dtype)

    # ---- pad C_out to a sublane-friendly multiple of 8 --------------------
    Co_p = _round_up(C_out, 8)
    if Co_p != C_out:
        w_t = jnp.pad(w_t, ((0, Co_p - C_out), (0, 0)))
        bias = jnp.pad(bias, ((0, Co_p - C_out),))
    bias = bias.reshape(Co_p, 1)

    # ---- tiling ------------------------------------------------------------
    isz = jnp.dtype(x.dtype).itemsize

    # C_out tile: whole when small; 256-row tiles (multiple of 8) when large.
    if Co_p > tco_cap:
        TCO = tco_cap
        Co_pp = _round_up(Co_p, TCO)
        if Co_pp != Co_p:
            w_t = jnp.pad(w_t, ((0, Co_pp - Co_p), (0, 0)))
            bias = jnp.pad(bias, ((0, Co_pp - Co_p), (0, 0)))
        Co_p = Co_pp
    else:
        TCO = Co_p

    # K tile: keep whole when small (block == full dim), otherwise 512-wide
    # tiles (zero padding of LHS/weights contributes nothing to the dot).
    if K > 1024:
        TK = 512
        Kp = _round_up(K, TK)
    else:
        TK = K
        Kp = K
    if Kp != K:
        rhs = jnp.pad(rhs, ((0, Kp - K), (0, 0)))
        w_t = jnp.pad(w_t, ((0, 0), (0, Kp - K)))

    # M tile: largest lane-dense (multiple of 128) tile that fits the VMEM
    # budget with double-buffered inputs/outputs + the f32 accumulator.
    def _vmem_bytes(tm):
        return (2 * TK * tm * isz            # patches   (double buffered)
                + 2 * TCO * tm * isz         # output    (double buffered)
                + TCO * tm * 4               # f32 accumulator
                + 2 * TCO * TK * isz         # weights   (double buffered)
                + 2 * TCO * 128 * 4)         # bias      (lane-padded)

    if M > 128:
        TM = 128
        for cand in (2048, 1024, 512, 256, 128):
            if cand <= tm_cap and _vmem_bytes(cand) <= vmem_budget:
                TM = cand
                break
        TM = min(TM, _round_up(M, 128))
        Mp = _round_up(M, TM)
    else:
        TM = M                                # single tile == full dim
        Mp = M
    if Mp != M:
        rhs = jnp.pad(rhs, ((0, 0), (0, Mp - M)))

    grid = (Co_p // TCO, Mp // TM, Kp // TK)

    out = pl.pallas_call(
        _relu_conv_bn_kernel,
        out_shape=jax.ShapeDtypeStruct((Co_p, Mp), x.dtype),
        grid_spec=pltpu.PrefetchScalarGridSpec(
            num_scalar_prefetch=0,
            grid=grid,
            in_specs=[
                pl.BlockSpec((TCO, TK), lambda co, i, kk: (co, kk)),   # weights
                pl.BlockSpec((TK, TM), lambda co, i, kk: (kk, i)),     # patches
                pl.BlockSpec((TCO, 1), lambda co, i, kk: (co, 0)),     # bias
            ],
            out_specs=pl.BlockSpec((TCO, TM), lambda co, i, kk: (co, i)),
            scratch_shapes=[pltpu.VMEM((TCO, TM), jnp.float32)],
        ),
        compiler_params=pltpu.CompilerParams(
            dimension_semantics=("parallel", "parallel", "arbitrary"),
        ),
    )(w_t, rhs, bias)

    out = out[:C_out, :M]
    y = out.reshape(C_out, B, Ho, Wo)
    return jnp.transpose(y, (1, 0, 2, 3))        # back to NCHW


def _reference(x, conv_weight, gamma, beta, mean, var, *, stride, eps=1e-5):
    """Pure-JAX reference: ReLU -> conv -> eval-mode BN."""
    kH = conv_weight.shape[2]
    s = int(stride)
    pad = 0 if (s == 1 and kH == 1) else 1
    xr = jnp.maximum(x, 0.0)
    out = jax.lax.conv_general_dilated(
        xr, conv_weight, window_strides=(s, s),
        padding=((pad, pad), (pad, pad)),
        dimension_numbers=("NCHW", "OIHW", "NCHW"))
    scale = gamma * jax.lax.rsqrt(var + eps)
    shift = beta - mean * scale
    return out * scale[None, :, None, None] + shift[None, :, None, None]


if __name__ == "__main__":
    key = jax.random.PRNGKey(0)
    ks = jax.random.split(key, 8)

    B, C_in, H, W = 2, 4, 16, 16
    x = jax.random.normal(ks[0], (B, C_in, H, W), dtype=jnp.float32)

    # ---- 3x3, stride 1 (pad 1) ----
    C_out = 8
    w3 = jax.random.normal(ks[1], (C_out, C_in, 3, 3), jnp.float32) * 0.1
    gamma = jax.random.uniform(ks[2], (C_out,), jnp.float32, minval=0.5, maxval=1.5)
    beta = jax.random.normal(ks[3], (C_out,), jnp.float32) * 0.1
    mean = jax.random.normal(ks[4], (C_out,), jnp.float32) * 0.1
    var = jax.random.uniform(ks[5], (C_out,), jnp.float32, minval=0.5, maxval=1.5)

    y3 = relu_conv_bn(x, w3, gamma, beta, mean, var, stride=1)
    jax.block_until_ready(y3)
    ref3 = _reference(x, w3, gamma, beta, mean, var, stride=1)
    assert y3.shape == (B, C_out, H, W), y3.shape
    assert y3.dtype == x.dtype
    err3 = float(jnp.max(jnp.abs(y3 - ref3)))
    assert err3 < 1e-4, f"3x3 s1 mismatch: {err3}"

    # ---- 3x3, stride 2 (pad 1, strided im2col path) ----
    y3s2 = relu_conv_bn(x, w3, gamma, beta, mean, var, stride=2)
    jax.block_until_ready(y3s2)
    ref3s2 = _reference(x, w3, gamma, beta, mean, var, stride=2)
    assert y3s2.shape == ref3s2.shape, (y3s2.shape, ref3s2.shape)
    err3s2 = float(jnp.max(jnp.abs(y3s2 - ref3s2)))
    assert err3s2 < 1e-4, f"3x3 s2 mismatch: {err3s2}"

    # ---- 1x1, stride 1 (pad 0, pure matmul fast path, affine=False style) ----
    C_out1 = 16
    w1 = jax.random.normal(ks[6], (C_out1, C_in, 1, 1), jnp.float32) * 0.1
    g1 = jnp.ones((C_out1,), jnp.float32)        # affine=False -> gamma=1, beta=0
    b1 = jnp.zeros((C_out1,), jnp.float32)
    m1 = jax.random.normal(ks[7], (C_out1,), jnp.float32) * 0.1
    v1 = jnp.full((C_out1,), 0.9, jnp.float32)

    y1 = relu_conv_bn(x, w1, g1, b1, m1, v1, stride=1)
    jax.block_until_ready(y1)
    ref1 = _reference(x, w1, g1, b1, m1, v1, stride=1)
    assert y1.shape == (B, C_out1, H, W), y1.shape
    err1 = float(jnp.max(jnp.abs(y1 - ref1)))
    assert err1 < 1e-4, f"1x1 mismatch: {err1}"

    print("KERNEL_OK")
</pallas_src>

<mosaic_0001>
module attributes {stable_mosaic.version = 11 : i64} {
  func.func @_relu_conv_bn_kernel(%arg0: i32, %arg1: i32, %arg2: i32, %arg3: memref<8x36xf32, #tpu.memory_space<vmem>>, %arg4: memref<36x512xf32, #tpu.memory_space<vmem>>, %arg5: memref<8x1xf32, #tpu.memory_space<vmem>>, %arg6: memref<8x512xf32, #tpu.memory_space<vmem>>, %arg7: memref<8x512xf32, #tpu.memory_space<vmem>>) attributes {dimension_semantics = [#tpu.dimension_semantics<parallel>, #tpu.dimension_semantics<parallel>, #tpu.dimension_semantics<arbitrary>], iteration_bounds = array<i64: 1, 1, 1>, scalar_prefetch = 0 : i64, scratch_operands = 1 : i64, tpu.core_type = #tpu.core_type<tc>, window_params = [{transform_indices = @transform_0, window_bounds = array<i64: 8, 36>}, {transform_indices = @transform_1, window_bounds = array<i64: 36, 512>}, {transform_indices = @transform_2, window_bounds = array<i64: 8, 1>}, {transform_indices = @transform_3, window_bounds = array<i64: 8, 512>}]} {
    %c0_i32 = arith.constant 0 : i32
    %0 = arith.cmpi eq, %arg2, %c0_i32 : i32
    %1 = arith.extui %0 : i1 to i32
    %c0_i32_0 = arith.constant 0 : i32
    %2 = arith.cmpi ne, %1, %c0_i32_0 : i32
    scf.if %2 {
      %cst_11 = arith.constant 0.000000e+00 : f32
      %14 = vector.broadcast %cst_11 : f32 to vector<8x512xf32>
      %c0_12 = arith.constant 0 : index
      %c0_13 = arith.constant 0 : index
      %15 = vector.load %arg7[%c0_12, %c0_13] : memref<8x512xf32, #tpu.memory_space<vmem>>, vector<8x512xf32>
      tpu.vector_store %arg7[%c0_12, %c0_13], %14 {strides = array<i32>} : memref<8x512xf32, #tpu.memory_space<vmem>>, vector<8x512xf32>,
    } else {
    }
    %c0 = arith.constant 0 : index
    %c0_1 = arith.constant 0 : index
    %3 = vector.load %arg4[%c0, %c0_1] : memref<36x512xf32, #tpu.memory_space<vmem>>, vector<36x512xf32>
    %cst = arith.constant 0.000000e+00 : f32
    %4 = vector.broadcast %cst : f32 to vector<36x512xf32>
    %5 = arith.maximumf %3, %4 : vector<36x512xf32>
    %c0_2 = arith.constant 0 : index
    %c0_3 = arith.constant 0 : index
    %6 = vector.load %arg7[%c0_2, %c0_3] : memref<8x512xf32, #tpu.memory_space<vmem>>, vector<8x512xf32>
    %c0_4 = arith.constant 0 : index
    %c0_5 = arith.constant 0 : index
    %7 = vector.load %arg3[%c0_4, %c0_5] : memref<8x36xf32, #tpu.memory_space<vmem>>, vector<8x36xf32>
    %cst_6 = arith.constant dense<0.000000e+00> : vector<8x512xf32>
    %8 = tpu.matmul %7, %5, %cst_6 {dimension_numbers = #tpu.dot_dimension_numbers<[1], [0], [0], [1], [0, 0, 1, 1], [], []>} : vector<8x36xf32>, vector<36x512xf32>, vector<8x512xf32> -> vector<8x512xf32>
    %9 = arith.addf %6, %8 : vector<8x512xf32>
    %c0_7 = arith.constant 0 : index
    %c0_8 = arith.constant 0 : index
    %10 = vector.load %arg7[%c0_7, %c0_8] : memref<8x512xf32, #tpu.memory_space<vmem>>, vector<8x512xf32>
    tpu.vector_store %arg7[%c0_7, %c0_8], %9 {strides = array<i32>} : memref<8x512xf32, #tpu.memory_space<vmem>>, vector<8x512xf32>,
    %c0_i32_9 = arith.constant 0 : i32
    %11 = arith.cmpi eq, %arg2, %c0_i32_9 : i32
    %12 = arith.extui %11 : i1 to i32
    %c0_i32_10 = arith.constant 0 : i32
    %13 = arith.cmpi ne, %12, %c0_i32_10 : i32
    scf.if %13 {
      %c0_11 = arith.constant 0 : index
      %c0_12 = arith.constant 0 : index
      %14 = vector.load %arg7[%c0_11, %c0_12] : memref<8x512xf32, #tpu.memory_space<vmem>>, vector<8x512xf32>
      %c0_13 = arith.constant 0 : index
      %c0_14 = arith.constant 0 : index
      %15 = vector.load %arg5[%c0_13, %c0_14] : memref<8x1xf32, #tpu.memory_space<vmem>>, vector<8x1xf32>
      %16 = vector.broadcast %15 : vector<8x1xf32> to vector<8x512xf32>
      %17 = arith.addf %14, %16 : vector<8x512xf32>
      %c0_15 = arith.constant 0 : index
      %c0_16 = arith.constant 0 : index
      %18 = vector.load %arg6[%c0_15, %c0_16] : memref<8x512xf32, #tpu.memory_space<vmem>>, vector<8x512xf32>
      tpu.vector_store %arg6[%c0_15, %c0_16], %17 {strides = array<i32>} : memref<8x512xf32, #tpu.memory_space<vmem>>, vector<8x512xf32>,
    } else {
    }
    return
  }
  func.func @transform_0(%arg0: i32, %arg1: i32, %arg2: i32) -> (i32, i32) {
    %c0_i32 = arith.constant 0 : i32
    return %arg0, %arg2 : i32, i32
  }
  func.func @transform_1(%arg0: i32, %arg1: i32, %arg2: i32) -> (i32, i32) {
    %c0_i32 = arith.constant 0 : i32
    return %arg2, %arg1 : i32, i32
  }
  func.func @transform_2(%arg0: i32, %arg1: i32, %arg2: i32) -> (i32, i32) {
    %c0_i32 = arith.constant 0 : i32
    %c0_i32_0 = arith.constant 0 : i32
    return %arg0, %c0_i32 : i32, i32
  }
  func.func @transform_3(%arg0: i32, %arg1: i32, %arg2: i32) -> (i32, i32) {
    %c0_i32 = arith.constant 0 : i32
    return %arg0, %arg1 : i32, i32
  }
}

</mosaic_0001>

<llo_original>
// kernel: tpu_custom_call.1
$region0: #{tpu_custom_call.1}
  #allocation0 [shape = 'u32[]', space=smem, size = 0x4, offset = 0x4, fixed_abs, tag = 'smem constant byte address 0x4 - core index']
  #allocation1 [shape = 'u32[72,128]{1,0:T(1,128)}', space=vmem, size = 0x9000, scoped, tag = 'internal scratch']
  #allocation2 [shape = 'f32[8,512]{1,0:T(8,128)}', space=vmem, size = 0x4000, scoped, tag = 'scratch operand']
  %s0 = inlined_call_operand.vmem [shape: f32[8,36], index: 0, kind: input, shape index: {}]
  %s1 = inlined_call_operand.hbm [shape: f32[36,512], index: 1, kind: input, shape index: {}]
  %s2 = inlined_call_operand.vmem [shape: f32[8,1], index: 2, kind: input, shape index: {}]
  %s3 = inlined_call_operand.hbm [shape: f32[8,512], index: 3, kind: output, shape index: {}]
  %s4 = sld [smem:[#allocation0]]
  $region34: #{tpu_custom_call.1} parent=0
    _
  %s6 = ssub.s32 1, %s4
  %s7 = scalar_select 0, %s6, %s4
  $region1: #{tpu_custom_call.1} parent=0
    #allocation3 [shape = 'u8[81920]{0}', space=vmem, size = 0x14000, scoped, tag = 'input window, operand 1, single buffered']
    #allocation4 [shape = 's32[1]{0}', space=sflag, size = 0x4, scoped, tag = 'scoped memory for tpu_custom_call.1']
    #allocation5 [shape = 's32[1]{0}', space=sflag, size = 0x4, scoped, tag = 'scoped memory for tpu_custom_call.1']
    #allocation6 [shape = 'u8[16384]{0}', space=vmem, size = 0x4000, scoped, tag = 'output window, operand 0, single buffered']
    %8 = vsyncpa [#allocation4], 0
    %9 = vsyncpa [#allocation5], 0
    // Predicated region
    $region2: #{tpu_custom_call.1} parent=1 // pred_check
      _
    $region3: #{tpu_custom_call.1} parent=1 // pred_check_branch
      %11 = sbr.rel (0) target = $region5
    $region4: #{tpu_custom_call.1} parent=1 // pred_region
      _
    $region5: #{tpu_custom_call.1} parent=1 // pred_fallthru
      _
    // Predicated region
    $region6: #{tpu_custom_call.1} parent=1 // pred_check
      _
    $region7: #{tpu_custom_call.1} parent=1 // pred_check_branch
      %13 = sbr.rel (0) target = $region9
    $region8: #{tpu_custom_call.1} parent=1 // pred_region
      %15 = vsyncadd [#allocation4], 0
      %s16 = sshll.u32 %s1, 4
      %s17 = int_to_ptr.hbm [resolvable:$true] %s16
      %s18 = sshll.u32 [#allocation3], 4
      %s19 = int_to_ptr.vmem [resolvable:$true] %s18
      %24 = dma.hbm_to_vmem [thread:$0]  %s17, 2560, %s19, [#allocation4], 512, 512, 32
    $region9: #{tpu_custom_call.1} parent=1 // pred_fallthru
      _
    // Predicated region
    $region10: #{tpu_custom_call.1} parent=1 // pred_check
      _
    $region11: #{tpu_custom_call.1} parent=1 // pred_check_branch
      %26 = sbr.rel (0) target = $region13
    $region12: #{tpu_custom_call.1} parent=1 // pred_region
      _
    $region13: #{tpu_custom_call.1} parent=1 // pred_fallthru
      _
    // Predicated region
    $region14: #{tpu_custom_call.1} parent=1 // pred_check
      _
    $region15: #{tpu_custom_call.1} parent=1 // pred_check_branch
      %28 = sbr.rel (0) target = $region17
    $region16: #{tpu_custom_call.1} parent=1 // pred_region
      %30 = dma.done [#allocation4], 2560
    $region17: #{tpu_custom_call.1} parent=1 // pred_fallthru
      _
    %p31 = scmp.eq.s32.totalorder 0, 0
    // Predicated region
    $region18: #{tpu_custom_call.1} parent=1 // pred_check
      %p32 = pneg %p31
    $region19: #{tpu_custom_call.1} parent=1 // pred_check_branch
      %34 = sbr.rel (%p32) target = $region21
    $region20: #{tpu_custom_call.1} parent=1 // pred_region
      %35 = vst [vmem:[#allocation2] sm:$0xff] 0.0
      %36 = vst [vmem:[#allocation2 + $0x8] sm:$0xff] 0.0
      %37 = vst [vmem:[#allocation2 + $0x10] sm:$0xff] 0.0
      %38 = vst [vmem:[#allocation2 + $0x18] sm:$0xff] 0.0
    $region21: #{tpu_custom_call.1} parent=1 // pred_fallthru
      _
    %v39 = vld [vmem:[#allocation3] sm:$0xff]
    %v40 = vld [vmem:[#allocation3 + $0x8] sm:$0xff]
    %v41 = vld [vmem:[#allocation3 + $0x10] sm:$0xff]
    %v42 = vld [vmem:[#allocation3 + $0x18] sm:$0xff]
    %v43 = vld [vmem:[#allocation3 + $0x20] sm:$0xff]
    %v44 = vld [vmem:[#allocation3 + $0x28] sm:$0xff]
    %v45 = vld [vmem:[#allocation3 + $0x30] sm:$0xff]
    %v46 = vld [vmem:[#allocation3 + $0x38] sm:$0xff]
    %v47 = vld [vmem:[#allocation3 + $0x40] sm:$0xff]
    %v48 = vld [vmem:[#allocation3 + $0x48] sm:$0xff]
    %v49 = vld [vmem:[#allocation3 + $0x50] sm:$0xff]
    %v50 = vld [vmem:[#allocation3 + $0x58] sm:$0xff]
    %v51 = vld [vmem:[#allocation3 + $0x60] sm:$0xff]
    %v52 = vld [vmem:[#allocation3 + $0x68] sm:$0xff]
    %v53 = vld [vmem:[#allocation3 + $0x70] sm:$0xff]
    %v54 = vld [vmem:[#allocation3 + $0x78] sm:$0xff]
    %v55 = vld [vmem:[#allocation3 + $0x80] sm:$0xf]
    %v56 = vld [vmem:[#allocation3 + $0x88] sm:$0xf]
    %v57 = vld [vmem:[#allocation3 + $0x90] sm:$0xf]
    %v58 = vld [vmem:[#allocation3 + $0x98] sm:$0xf]
    %v59 = vmax.f32 %v39, 0.0
    %v60 = vmax.f32 %v40, 0.0
    %v61 = vmax.f32 %v41, 0.0
    %v62 = vmax.f32 %v42, 0.0
    %v63 = vmax.f32 %v43, 0.0
    %v64 = vmax.f32 %v44, 0.0
    %v65 = vmax.f32 %v45, 0.0
    %v66 = vmax.f32 %v46, 0.0
    %v67 = vmax.f32 %v47, 0.0
    %v68 = vmax.f32 %v48, 0.0
    %v69 = vmax.f32 %v49, 0.0
    %v70 = vmax.f32 %v50, 0.0
    %v71 = vmax.f32 %v51, 0.0
    %v72 = vmax.f32 %v52, 0.0
    %v73 = vmax.f32 %v53, 0.0
    %v74 = vmax.f32 %v54, 0.0
    %v75 = vmax.f32 %v55, 0.0
    %v76 = vmax.f32 %v56, 0.0
    %v77 = vmax.f32 %v57, 0.0
    %v78 = vmax.f32 %v58, 0.0
    %v79 = vld [vmem:[#allocation2] sm:$0xff]
    %v80 = vld [vmem:[#allocation2 + $0x8] sm:$0xff]
    %v81 = vld [vmem:[#allocation2 + $0x10] sm:$0xff]
    %v82 = vld [vmem:[#allocation2 + $0x18] sm:$0xff]
    %v83 = vld [vmem:[%s0] sm:$0xff]
    %vm84 = vcmask 293888
    %v86 = vsel %vm84, %v83, 0
    %vm88 = vcmask 1043456
    %v90 = vsel %vm88, %v75, 0
    %v93 = vsel %vm88, %v76, 0
    %v96 = vsel %vm88, %v77, 0
    %v99 = vsel %vm88, %v78, 0
    %101 = vmatpush.msra.mxu0 0.0
    %102 = vmatpush.msra.mxu0 0.0
    %103 = vmatpush.msra.mxu0 0.0
    %104 = vmatpush.msra.mxu0 0.0
    %105 = vmatpush.msra.mxu0 0.0
    %106 = vmatpush.msra.mxu0 0.0
    %107 = vmatpush.msra.mxu0 0.0
    %108 = vmatpush.msra.mxu0 0.0
    %109 = vmatpush.msra.mxu0 0.0
    %110 = vmatpush.msra.mxu0 0.0
    %111 = vmatpush.msra.mxu0 0.0
    %112 = vmatpush.msra.mxu0 %v90
    %113 = vmatpush.msra.mxu0 %v71
    %114 = vmatpush.msra.mxu0 %v67
    %115 = vmatpush.msra.mxu0 %v63
    %116 = vmatpush.msra.mxu0 %v59
    %117 = vmatmul.f32.gmra.mxu0 %v86
    %v118 = vpop.f32.mrf.mxu0
    %v119 = vadd.f32 0.0, %v118
    %120 = vdwg.mxu0
    %121 = vmatpush.msra.mxu0 0.0
    %122 = vmatpush.msra.mxu0 0.0
    %123 = vmatpush.msra.mxu0 0.0
    %124 = vmatpush.msra.mxu0 0.0
    %125 = vmatpush.msra.mxu0 0.0
    %126 = vmatpush.msra.mxu0 0.0
    %127 = vmatpush.msra.mxu0 0.0
    %128 = vmatpush.msra.mxu0 0.0
    %129 = vmatpush.msra.mxu0 0.0
    %130 = vmatpush.msra.mxu0 0.0
    %131 = vmatpush.msra.mxu0 0.0
    %132 = vmatpush.msra.mxu0 %v93
    %133 = vmatpush.msra.mxu0 %v72
    %134 = vmatpush.msra.mxu0 %v68
    %135 = vmatpush.msra.mxu0 %v64
    %136 = vmatpush.msra.mxu0 %v60
    %137 = vmatmul.f32.gmra.mxu0 %v86
    %v138 = vpop.f32.mrf.mxu0
    %v139 = vadd.f32 0.0, %v138
    %140 = vdwg.mxu0
    %141 = vmatpush.msra.mxu0 0.0
    %142 = vmatpush.msra.mxu0 0.0
    %143 = vmatpush.msra.mxu0 0.0
    %144 = vmatpush.msra.mxu0 0.0
    %145 = vmatpush.msra.mxu0 0.0
    %146 = vmatpush.msra.mxu0 0.0
    %147 = vmatpush.msra.mxu0 0.0
    %148 = vmatpush.msra.mxu0 0.0
    %149 = vmatpush.msra.mxu0 0.0
    %150 = vmatpush.msra.mxu0 0.0
    %151 = vmatpush.msra.mxu0 0.0
    %152 = vmatpush.msra.mxu0 %v96
    %153 = vmatpush.msra.mxu0 %v73
    %154 = vmatpush.msra.mxu0 %v69
    %155 = vmatpush.msra.mxu0 %v65
    %156 = vmatpush.msra.mxu0 %v61
    %157 = vmatmul.f32.gmra.mxu0 %v86
    %v158 = vpop.f32.mrf.mxu0
    %v159 = vadd.f32 0.0, %v158
    %160 = vdwg.mxu0
    %161 = vmatpush.msra.mxu0 0.0
    %162 = vmatpush.msra.mxu0 0.0
    %163 = vmatpush.msra.mxu0 0.0
    %164 = vmatpush.msra.mxu0 0.0
    %165 = vmatpush.msra.mxu0 0.0
    %166 = vmatpush.msra.mxu0 0.0
    %167 = vmatpush.msra.mxu0 0.0
    %168 = vmatpush.msra.mxu0 0.0
    %169 = vmatpush.msra.mxu0 0.0
    %170 = vmatpush.msra.mxu0 0.0
    %171 = vmatpush.msra.mxu0 0.0
    %172 = vmatpush.msra.mxu0 %v99
    %173 = vmatpush.msra.mxu0 %v74
    %174 = vmatpush.msra.mxu0 %v70
    %175 = vmatpush.msra.mxu0 %v66
    %176 = vmatpush.msra.mxu0 %v62
    %177 = vmatmul.f32.gmra.mxu0 %v86
    %v178 = vpop.f32.mrf.mxu0
    %v179 = vadd.f32 0.0, %v178
    %180 = vdwg.mxu0
    %v181 = vadd.f32 %v79, %v119
    %v182 = vadd.f32 %v80, %v139
    %v183 = vadd.f32 %v81, %v159
    %v184 = vadd.f32 %v82, %v179
    %185 = vst [vmem:[#allocation2] sm:$0xff] %v181
    %186 = vst [vmem:[#allocation2 + $0x8] sm:$0xff] %v182
    %187 = vst [vmem:[#allocation2 + $0x10] sm:$0xff] %v183
    %188 = vst [vmem:[#allocation2 + $0x18] sm:$0xff] %v184
    // Predicated region
    $region22: #{tpu_custom_call.1} parent=1 // pred_check
      %p189 = pneg %p31
    $region23: #{tpu_custom_call.1} parent=1 // pred_check_branch
      %191 = sbr.rel (%p189) target = $region25
    $region24: #{tpu_custom_call.1} parent=1 // pred_region
      %v192 = vld [vmem:[#allocation2] sm:$0xff]
      %v193 = vld [vmem:[#allocation2 + $0x8] sm:$0xff]
      %v194 = vld [vmem:[#allocation2 + $0x10] sm:$0xff]
      %v195 = vld [vmem:[#allocation2 + $0x18] sm:$0xff]
      %v196 = vld [vmem:[%s2] sm:$0xff]
      %198 = vset.pattern.permute.xlu0 0
      %199 = vperm.xlu0 %198, %v196
      %v200 = vpop.permute.xlu0 %199
      %v202 = vadd.f32 %v192, %v200
      %v203 = vadd.f32 %v193, %v200
      %v204 = vadd.f32 %v194, %v200
      %v205 = vadd.f32 %v195, %v200
      %206 = vst [vmem:[#allocation6] sm:$0xff] %v202
      %207 = vst [vmem:[#allocation6 + $0x8] sm:$0xff] %v203
      %208 = vst [vmem:[#allocation6 + $0x10] sm:$0xff] %v204
      %209 = vst [vmem:[#allocation6 + $0x18] sm:$0xff] %v205
    $region25: #{tpu_custom_call.1} parent=1 // pred_fallthru
      _
    // Predicated region
    $region26: #{tpu_custom_call.1} parent=1 // pred_check
      _
    $region27: #{tpu_custom_call.1} parent=1 // pred_check_branch
      %211 = sbr.rel (0) target = $region29
    $region28: #{tpu_custom_call.1} parent=1 // pred_region
      %213 = vsyncadd [#allocation5], 0
      %s215 = sshll.u32 [#allocation6], 4
      %s216 = int_to_ptr.vmem [resolvable:$true] %s215
      %s217 = sshll.u32 %s3, 4
      %s218 = int_to_ptr.hbm [resolvable:$true] %s217
      %220 = dma.vmem_to_hbm [thread:$0]  %s216, 512, %s218, [#allocation5]
    $region29: #{tpu_custom_call.1} parent=1 // pred_fallthru
      _
    // Predicated region
    $region30: #{tpu_custom_call.1} parent=1 // pred_check
      _
    $region31: #{tpu_custom_call.1} parent=1 // pred_check_branch
      %222 = sbr.rel (0) target = $region33
    $region32: #{tpu_custom_call.1} parent=1 // pred_region
      %224 = dma.done [#allocation5], 512
    $region33: #{tpu_custom_call.1} parent=1 // pred_fallthru
      _
    %225 = vsyncpa [#allocation4], 1
    %226 = vsyncpa [#allocation5], 1

</llo_original>
